<compile_context>
chip_gen: v7x
topology: tpu7x:2x2x1
jax: 0.10.0
libtpu: 0.0.40
codegen_flags: <defaults>
</compile_context>

<pallas_src>
import math

import jax
import jax.numpy as jnp
from jax.experimental import pallas as pl
from jax.experimental.pallas import tpu as pltpu


# ------------------------------ helpers --------------------------------------

def _round_up(x, m):
    return (x + m - 1) // m * m


def _pick_tn(out_features):
    """Lane-dense output tile that divides O exactly when possible; prefer >=2 j-steps."""
    for t in (256, 128):
        if out_features % t == 0 and out_features // t >= 2:
            return t
    for t in (256, 128):
        if out_features % t == 0:
            return t
    return _round_up(min(out_features, 256), 128)     # pad (once, at prepare time)


def _pick_tk(in_features):
    """Reduction tile that divides I exactly when possible."""
    for t in (1024, 512, 256, 128):
        if in_features % t == 0:
            return t
    return _round_up(min(in_features, 512), 128)      # pad (once, at prepare time)


def _pad2(a, rows, cols):
    pr, pc = rows - a.shape[0], cols - a.shape[1]
    if pr or pc:
        a = jnp.pad(a, ((0, pr), (0, pc)))
    return a


def _pad_row(v, cols):
    """1-D (n,) -> (1, cols) zero-padded lane-dense row."""
    pc = cols - v.shape[0]
    if pc:
        v = jnp.pad(v, (0, pc))
    return v.reshape(1, cols)


# ------------------------------ kernels --------------------------------------
# Weights are pre-transposed to (I, O): blocks are (tk, tn) and feed the MXU with the
# standard (tm,tk)@(tk,tn) contraction -- no per-tile transpose.

def _noisy_train_kernel(x_ref, wmu_ref, wsig_ref, weps_ref,
                        bmu_ref, bsig_ref, beps_ref, o_ref, acc_ref):
    """General epsilon: weight = mu + sigma * eps, y = x @ weight + bias."""
    k = pl.program_id(2)

    @pl.when(k == 0)
    def _():
        acc_ref[...] = jnp.zeros_like(acc_ref)

    w = wmu_ref[...] + wsig_ref[...] * weps_ref[...]          # (tk, tn), param dtype
    x = x_ref[...].astype(w.dtype)                            # (tm, tk)
    acc_ref[...] += jnp.dot(x, w, preferred_element_type=jnp.float32)

    @pl.when(k == pl.num_programs(2) - 1)
    def _():
        b = bmu_ref[...] + bsig_ref[...] * beps_ref[...]      # (1, tn) f32
        o_ref[...] = (acc_ref[...] + b).astype(o_ref.dtype)


def _noisy_factored_kernel(x_ref, wmu_ref, wsig_ref, ein_ref, eout_ref,
                           bmu_ref, bsig_ref, o_ref, acc_mu_ref, acc_sig_ref):
    """Factored noise (weight_epsilon == outer(eps_out, eps_in), bias_epsilon == eps_out):
       y = x @ Wmu.T + eps_out * ((x * eps_in) @ Wsig.T) + (bmu + bsig * eps_out)."""
    k = pl.program_id(2)

    @pl.when(k == 0)
    def _():
        acc_mu_ref[...] = jnp.zeros_like(acc_mu_ref)
        acc_sig_ref[...] = jnp.zeros_like(acc_sig_ref)

    x = x_ref[...]                                            # (tm, tk) f32
    xe = x * ein_ref[...]                                     # broadcast (1, tk)
    wmu = wmu_ref[...]                                        # (tk, tn) param dtype
    wsig = wsig_ref[...]
    mdt = wmu.dtype
    acc_mu_ref[...] += jnp.dot(x.astype(mdt), wmu,
                               preferred_element_type=jnp.float32)
    acc_sig_ref[...] += jnp.dot(xe.astype(mdt), wsig,
                                preferred_element_type=jnp.float32)

    @pl.when(k == pl.num_programs(2) - 1)
    def _():
        eo = eout_ref[...]                                    # (1, tn) f32
        b = bmu_ref[...] + bsig_ref[...] * eo
        o_ref[...] = (acc_mu_ref[...] + eo * acc_sig_ref[...] + b).astype(o_ref.dtype)


def _linear_mu_direct_kernel(x_ref, wmu_ref, bmu_ref, o_ref):
    """Eval fast path (f32 output): accumulate directly into the resident output tile."""
    k = pl.program_id(2)

    @pl.when(k == 0)
    def _():
        o_ref[...] = jnp.zeros_like(o_ref)

    w = wmu_ref[...]
    o_ref[...] = o_ref[...] + jnp.dot(x_ref[...].astype(w.dtype), w,
                                      preferred_element_type=jnp.float32)

    @pl.when(k == pl.num_programs(2) - 1)
    def _():
        o_ref[...] = o_ref[...] + bmu_ref[...]


def _linear_mu_acc_kernel(x_ref, wmu_ref, bmu_ref, o_ref, acc_ref):
    """Eval fast path for non-f32 outputs (needs an f32 scratch accumulator)."""
    k = pl.program_id(2)

    @pl.when(k == 0)
    def _():
        acc_ref[...] = jnp.zeros_like(acc_ref)

    w = wmu_ref[...]
    acc_ref[...] += jnp.dot(x_ref[...].astype(w.dtype), w,
                            preferred_element_type=jnp.float32)

    @pl.when(k == pl.num_programs(2) - 1)
    def _():
        o_ref[...] = (acc_ref[...] + bmu_ref[...]).astype(o_ref.dtype)


# ------------------------------ launcher --------------------------------------

def _launch(kernel, x, prep, mats, rows, row_axes, n_acc, n_matmuls):
    B, I = x.shape
    assert I == prep["I"], "input feature size mismatch"
    O, pO, pI = prep["O"], prep["pO"], prep["pI"]
    tn, tk = prep["tn"], prep["tk"]

    # Batch tile: 16-aligned (bf16 sublane packing), cap 512 so weights aren't
    # re-streamed per batch tile.  Split the batch when the parallel grid would
    # otherwise have a single step (v7x has 2 TensorCores).
    tm = min(_round_up(B, 16), 512)
    pB = _round_up(B, tm)
    if (pB // tm) * (pO // tn) < 2 and B > 16:
        tm = _round_up((B + 1) // 2, 16)
        pB = _round_up(B, tm)

    # Only x is padded per call; all persistent params were padded once at prepare time.
    xp = x if (pB == B and pI == I) else jnp.pad(x, ((0, pB - B), (0, pI - I)))

    grid = (pB // tm, pO // tn, pI // tk)
    in_specs = [pl.BlockSpec((tm, tk), lambda i, j, k: (i, k))]
    in_specs += [pl.BlockSpec((tk, tn), lambda i, j, k: (k, j))] * len(mats)
    for ax in row_axes:
        if ax == "k":      # tiled along the reduction (I) axis, e.g. eps_in
            in_specs.append(pl.BlockSpec((1, tk), lambda i, j, k: (0, k)))
        else:              # tiled along the output (O) axis, e.g. biases / eps_out
            in_specs.append(pl.BlockSpec((1, tn), lambda i, j, k: (0, j)))
    out_spec = pl.BlockSpec((tm, tn), lambda i, j, k: (i, j))

    x_b = jnp.dtype(x.dtype).itemsize
    p_b = jnp.dtype(prep["param_dtype"]).itemsize
    # Double-buffered per-step VMEM footprint + accumulators; declare the limit explicitly
    # so large tiles stay within v7x's 64 MiB physical / v5e's small scoped VMEM.
    est = (2 * tm * tk * x_b + 2 * len(mats) * tk * tn * p_b
           + 2 * tm * tn * x_b + n_acc * tm * tn * 4 + 4 * len(rows) * max(tk, tn) * 4)
    vmem_limit = int(min(60 << 20, max(32 << 20, 2 * est)))

    flops = 2 * pB * pO * pI * n_matmuls
    bytes_accessed = ((pO // tn) * pB * pI * x_b          # x re-read per j tile
                      + (pB // tm) * len(mats) * pI * pO * p_b
                      + pB * pO * x_b)

    out = pl.pallas_call(
        kernel,
        out_shape=jax.ShapeDtypeStruct((pB, pO), x.dtype),
        grid_spec=pltpu.PrefetchScalarGridSpec(
            num_scalar_prefetch=0,
            grid=grid,
            in_specs=in_specs,
            out_specs=out_spec,
            scratch_shapes=[pltpu.VMEM((tm, tn), jnp.float32)] * n_acc,
        ),
        compiler_params=pltpu.CompilerParams(
            dimension_semantics=("parallel", "parallel", "arbitrary"),
            vmem_limit_bytes=vmem_limit),
        cost_estimate=pl.CostEstimate(flops=int(flops), transcendentals=0,
                                      bytes_accessed=int(bytes_accessed)),
    )(xp, *mats, *rows)
    return out[:B, :O]


# ------------------------------ public API -------------------------------------

def prepare_noisy_linear(weight_mu, weight_sigma, bias_mu, bias_sigma, *,
                         eps_in=None, eps_out=None,
                         weight_epsilon=None, bias_epsilon=None,
                         param_dtype=jnp.float32):
    """One-time parameter preparation: transpose weights to (I, O), pad to tile-aligned
    shapes, and cast to the HBM storage dtype (bf16 halves the dominant HBM stream on
    v5e/v6e/v7x; f32 keeps full precision).  Pass (eps_in, eps_out) for the factored-noise
    training path (agilerl reset_noise; assumes bias_epsilon == eps_out), or
    (weight_epsilon, bias_epsilon) for arbitrary noise."""
    O, I = weight_mu.shape
    tn, tk = _pick_tn(O), _pick_tk(I)
    pO, pI = _round_up(O, tn), _round_up(I, tk)

    def prep_w(w):                       # (O, I) -> padded (pI, pO), storage dtype
        return _pad2(jnp.asarray(w, param_dtype).T, pI, pO)

    def prep_row_o(v):                   # (O,) -> (1, pO) f32 (bias traffic is tiny)
        return _pad_row(jnp.asarray(v, jnp.float32), pO)

    prep = dict(O=O, I=I, pO=pO, pI=pI, tn=tn, tk=tk,
                param_dtype=jnp.dtype(param_dtype),
                wmu_t=prep_w(weight_mu), wsig_t=prep_w(weight_sigma),
                bmu=prep_row_o(bias_mu), bsig=prep_row_o(bias_sigma))

    if eps_in is not None and eps_out is not None:
        # Factored path: the OxI weight_epsilon is never materialized or streamed.
        prep["eps_in"] = _pad_row(jnp.asarray(eps_in, jnp.float32), pI)
        prep["eps_out"] = prep_row_o(eps_out)
    elif weight_epsilon is not None:
        assert bias_epsilon is not None, "general path needs bias_epsilon"
        prep["weps_t"] = prep_w(weight_epsilon)
        prep["beps"] = prep_row_o(bias_epsilon)
    return prep


def noisy_linear_forward(x, prep, training=True):
    """Pallas-backed NoisyLinear.forward for prepared parameters."""
    if not training:
        # Eval fast path: only weight_mu / bias_mu are streamed.
        if x.dtype == jnp.float32:
            return _launch(_linear_mu_direct_kernel, x, prep,
                           mats=[prep["wmu_t"]], rows=[prep["bmu"]],
                           row_axes=["n"], n_acc=0, n_matmuls=1)
        return _launch(_linear_mu_acc_kernel, x, prep,
                       mats=[prep["wmu_t"]], rows=[prep["bmu"]],
                       row_axes=["n"], n_acc=1, n_matmuls=1)

    if "eps_in" in prep:
        # Preferred training path: factored noise, 2 weight streams instead of 3.
        return _launch(_noisy_factored_kernel, x, prep,
                       mats=[prep["wmu_t"], prep["wsig_t"]],
                       rows=[prep["eps_in"], prep["eps_out"],
                             prep["bmu"], prep["bsig"]],
                       row_axes=["k", "n", "n", "n"], n_acc=2, n_matmuls=2)

    return _launch(_noisy_train_kernel, x, prep,
                   mats=[prep["wmu_t"], prep["wsig_t"], prep["weps_t"]],
                   rows=[prep["bmu"], prep["bsig"], prep["beps"]],
                   row_axes=["n", "n", "n"], n_acc=1, n_matmuls=1)


# ------------- parameter construction (reset_parameters / reset_noise) ---------
# Plain JAX glue (host-side init), intentionally not a kernel.

def scale_noise(key, size):
    x = jax.random.normal(key, (size,), dtype=jnp.float32)
    return jnp.sign(x) * jnp.sqrt(jnp.abs(x))


def init_noisy_linear(key, in_features, out_features, std_init=0.4):
    k1, k2, k3, k4 = jax.random.split(key, 4)
    mu_range = 1.0 / math.sqrt(in_features)
    weight_mu = jax.random.uniform(k1, (out_features, in_features),
                                   minval=-mu_range, maxval=mu_range,
                                   dtype=jnp.float32)
    weight_sigma = jnp.full((out_features, in_features),
                            std_init / math.sqrt(in_features), dtype=jnp.float32)
    bias_mu = jax.random.uniform(k2, (out_features,),
                                 minval=-mu_range, maxval=mu_range,
                                 dtype=jnp.float32)
    bias_sigma = jnp.full((out_features,),
                          std_init / math.sqrt(out_features), dtype=jnp.float32)
    eps_in = scale_noise(k3, in_features)
    eps_out = scale_noise(k4, out_features)
    weight_epsilon = jnp.outer(eps_out, eps_in)      # epsilon_out.ger(epsilon_in)
    bias_epsilon = eps_out
    return dict(weight_mu=weight_mu, weight_sigma=weight_sigma,
                weight_epsilon=weight_epsilon, bias_mu=bias_mu,
                bias_sigma=bias_sigma, bias_epsilon=bias_epsilon,
                eps_in=eps_in, eps_out=eps_out)


# ------------------------------ tests -----------------------------------------

if __name__ == "__main__":
    key = jax.random.PRNGKey(0)
    kx, kp, kx2, kp2 = jax.random.split(key, 4)

    def reference(x, p, training=True):
        if training:
            w = p["weight_mu"] + p["weight_sigma"] * p["weight_epsilon"]
            b = p["bias_mu"] + p["bias_sigma"] * p["bias_epsilon"]
        else:
            w, b = p["weight_mu"], p["bias_mu"]
        return x @ w.T + b

    # --- small shapes (typical NoisyLinear RL head) ---
    B, IN, OUT = 8, 32, 16
    x = jax.random.normal(kx, (B, IN), dtype=jnp.float32)
    p = init_noisy_linear(kp, IN, OUT, std_init=0.4)

    prep_gen = prepare_noisy_linear(p["weight_mu"], p["weight_sigma"],
                                    p["bias_mu"], p["bias_sigma"],
                                    weight_epsilon=p["weight_epsilon"],
                                    bias_epsilon=p["bias_epsilon"],
                                    param_dtype=jnp.float32)
    prep_fac = prepare_noisy_linear(p["weight_mu"], p["weight_sigma"],
                                    p["bias_mu"], p["bias_sigma"],
                                    eps_in=p["eps_in"], eps_out=p["eps_out"],
                                    param_dtype=jnp.float32)

    y = noisy_linear_forward(x, prep_gen, training=True)
    jax.block_until_ready(y)
    assert jnp.allclose(y, reference(x, p, True), atol=1e-4, rtol=1e-4), "train mismatch"

    y_fac = noisy_linear_forward(x, prep_fac, training=True)
    jax.block_until_ready(y_fac)
    assert jnp.allclose(y_fac, reference(x, p, True), atol=2e-2, rtol=2e-2), \
        "factored mismatch"

    y_eval = noisy_linear_forward(x, prep_gen, training=False)
    jax.block_until_ready(y_eval)
    assert jnp.allclose(y_eval, reference(x, p, False), atol=1e-4, rtol=1e-4), \
        "eval mismatch"

    # --- larger shapes exercising the (M, N, K) grid, exact-divisor tiles, padding-free
    #     weight layout (O=384 -> tn=128), and the bf16-storage fast path ---
    B2, IN2, OUT2 = 256, 1024, 384
    x2 = jax.random.normal(kx2, (B2, IN2), dtype=jnp.float32)
    p2 = init_noisy_linear(kp2, IN2, OUT2, std_init=0.4)

    prep2_gen_f32 = prepare_noisy_linear(p2["weight_mu"], p2["weight_sigma"],
                                         p2["bias_mu"], p2["bias_sigma"],
                                         weight_epsilon=p2["weight_epsilon"],
                                         bias_epsilon=p2["bias_epsilon"],
                                         param_dtype=jnp.float32)
    prep2_fac_f32 = prepare_noisy_linear(p2["weight_mu"], p2["weight_sigma"],
                                         p2["bias_mu"], p2["bias_sigma"],
                                         eps_in=p2["eps_in"], eps_out=p2["eps_out"],
                                         param_dtype=jnp.float32)
    prep2_fac_bf16 = prepare_noisy_linear(p2["weight_mu"], p2["weight_sigma"],
                                          p2["bias_mu"], p2["bias_sigma"],
                                          eps_in=p2["eps_in"], eps_out=p2["eps_out"],
                                          param_dtype=jnp.bfloat16)
    ref2 = reference(x2, p2, True)

    y2 = noisy_linear_forward(x2, prep2_gen_f32, training=True)
    jax.block_until_ready(y2)
    assert jnp.allclose(y2, ref2, atol=1e-2, rtol=1e-2), "large train mismatch"

    y2f = noisy_linear_forward(x2, prep2_fac_f32, training=True)
    jax.block_until_ready(y2f)
    assert jnp.allclose(y2f, ref2, atol=5e-2, rtol=5e-2), "large factored mismatch"

    # bf16 param storage (halved HBM weight traffic), f32 accumulation; loose check.
    y2b = noisy_linear_forward(x2, prep2_fac_bf16, training=True)
    jax.block_until_ready(y2b)
    assert float(jnp.max(jnp.abs(y2b.astype(jnp.float32) - ref2))) < 0.25, \
        "bf16 path diverged"

    print("KERNEL_OK")
</pallas_src>

<mosaic_0001>
module attributes {stable_mosaic.version = 11 : i64} {
  func.func @_noisy_train_kernel(%arg0: i32, %arg1: i32, %arg2: i32, %arg3: memref<16x128xf32, #tpu.memory_space<vmem>>, %arg4: memref<128x128xf32, #tpu.memory_space<vmem>>, %arg5: memref<128x128xf32, #tpu.memory_space<vmem>>, %arg6: memref<128x128xf32, #tpu.memory_space<vmem>>, %arg7: memref<1x128xf32, #tpu.memory_space<vmem>>, %arg8: memref<1x128xf32, #tpu.memory_space<vmem>>, %arg9: memref<1x128xf32, #tpu.memory_space<vmem>>, %arg10: memref<16x128xf32, #tpu.memory_space<vmem>>, %arg11: memref<16x128xf32, #tpu.memory_space<vmem>>) attributes {dimension_semantics = [#tpu.dimension_semantics<parallel>, #tpu.dimension_semantics<parallel>, #tpu.dimension_semantics<arbitrary>], iteration_bounds = array<i64: 1, 1, 1>, scalar_prefetch = 0 : i64, scratch_operands = 1 : i64, tpu.core_type = #tpu.core_type<tc>, window_params = [{transform_indices = @transform_0, window_bounds = array<i64: 16, 128>}, {transform_indices = @transform_1, window_bounds = array<i64: 128, 128>}, {transform_indices = @transform_2, window_bounds = array<i64: 128, 128>}, {transform_indices = @transform_3, window_bounds = array<i64: 128, 128>}, {transform_indices = @transform_4, window_bounds = array<i64: 1, 128>}, {transform_indices = @transform_5, window_bounds = array<i64: 1, 128>}, {transform_indices = @transform_6, window_bounds = array<i64: 1, 128>}, {transform_indices = @transform_7, window_bounds = array<i64: 16, 128>}]} {
    %c0_i32 = arith.constant 0 : i32
    %0 = arith.cmpi eq, %arg2, %c0_i32 : i32
    %1 = arith.extui %0 : i1 to i32
    %c0_i32_0 = arith.constant 0 : i32
    %2 = arith.cmpi ne, %1, %c0_i32_0 : i32
    scf.if %2 {
      %cst_14 = arith.constant 0.000000e+00 : f32
      %16 = vector.broadcast %cst_14 : f32 to vector<16x128xf32>
      %c0_15 = arith.constant 0 : index
      %c0_16 = arith.constant 0 : index
      %17 = vector.load %arg11[%c0_15, %c0_16] : memref<16x128xf32, #tpu.memory_space<vmem>>, vector<16x128xf32>
      tpu.vector_store %arg11[%c0_15, %c0_16], %16 {strides = array<i32>} : memref<16x128xf32, #tpu.memory_space<vmem>>, vector<16x128xf32>,
    } else {
    }
    %c0 = arith.constant 0 : index
    %c0_1 = arith.constant 0 : index
    %3 = vector.load %arg4[%c0, %c0_1] : memref<128x128xf32, #tpu.memory_space<vmem>>, vector<128x128xf32>
    %c0_2 = arith.constant 0 : index
    %c0_3 = arith.constant 0 : index
    %4 = vector.load %arg5[%c0_2, %c0_3] : memref<128x128xf32, #tpu.memory_space<vmem>>, vector<128x128xf32>
    %c0_4 = arith.constant 0 : index
    %c0_5 = arith.constant 0 : index
    %5 = vector.load %arg6[%c0_4, %c0_5] : memref<128x128xf32, #tpu.memory_space<vmem>>, vector<128x128xf32>
    %6 = arith.mulf %4, %5 : vector<128x128xf32>
    %7 = arith.addf %3, %6 : vector<128x128xf32>
    %c0_6 = arith.constant 0 : index
    %c0_7 = arith.constant 0 : index
    %8 = vector.load %arg3[%c0_6, %c0_7] : memref<16x128xf32, #tpu.memory_space<vmem>>, vector<16x128xf32>
    %c0_8 = arith.constant 0 : index
    %c0_9 = arith.constant 0 : index
    %9 = vector.load %arg11[%c0_8, %c0_9] : memref<16x128xf32, #tpu.memory_space<vmem>>, vector<16x128xf32>
    %cst = arith.constant dense<0.000000e+00> : vector<16x128xf32>
    %10 = tpu.matmul %8, %7, %cst {dimension_numbers = #tpu.dot_dimension_numbers<[1], [0], [0], [1], [0, 0, 1, 1], [], []>} : vector<16x128xf32>, vector<128x128xf32>, vector<16x128xf32> -> vector<16x128xf32>
    %11 = arith.addf %9, %10 : vector<16x128xf32>
    %c0_10 = arith.constant 0 : index
    %c0_11 = arith.constant 0 : index
    %12 = vector.load %arg11[%c0_10, %c0_11] : memref<16x128xf32, #tpu.memory_space<vmem>>, vector<16x128xf32>
    tpu.vector_store %arg11[%c0_10, %c0_11], %11 {strides = array<i32>} : memref<16x128xf32, #tpu.memory_space<vmem>>, vector<16x128xf32>,
    %c0_i32_12 = arith.constant 0 : i32
    %13 = arith.cmpi eq, %arg2, %c0_i32_12 : i32
    %14 = arith.extui %13 : i1 to i32
    %c0_i32_13 = arith.constant 0 : i32
    %15 = arith.cmpi ne, %14, %c0_i32_13 : i32
    scf.if %15 {
      %c0_14 = arith.constant 0 : index
      %c0_15 = arith.constant 0 : index
      %16 = vector.load %arg7[%c0_14, %c0_15] : memref<1x128xf32, #tpu.memory_space<vmem>>, vector<1x128xf32>
      %c0_16 = arith.constant 0 : index
      %c0_17 = arith.constant 0 : index
      %17 = vector.load %arg8[%c0_16, %c0_17] : memref<1x128xf32, #tpu.memory_space<vmem>>, vector<1x128xf32>
      %c0_18 = arith.constant 0 : index
      %c0_19 = arith.constant 0 : index
      %18 = vector.load %arg9[%c0_18, %c0_19] : memref<1x128xf32, #tpu.memory_space<vmem>>, vector<1x128xf32>
      %19 = arith.mulf %17, %18 : vector<1x128xf32>
      %20 = arith.addf %16, %19 : vector<1x128xf32>
      %c0_20 = arith.constant 0 : index
      %c0_21 = arith.constant 0 : index
      %21 = vector.load %arg11[%c0_20, %c0_21] : memref<16x128xf32, #tpu.memory_space<vmem>>, vector<16x128xf32>
      %22 = vector.broadcast %20 : vector<1x128xf32> to vector<16x128xf32>
      %23 = arith.addf %21, %22 : vector<16x128xf32>
      %c0_22 = arith.constant 0 : index
      %c0_23 = arith.constant 0 : index
      %24 = vector.load %arg10[%c0_22, %c0_23] : memref<16x128xf32, #tpu.memory_space<vmem>>, vector<16x128xf32>
      tpu.vector_store %arg10[%c0_22, %c0_23], %23 {strides = array<i32>} : memref<16x128xf32, #tpu.memory_space<vmem>>, vector<16x128xf32>,
    } else {
    }
    return
  }
  func.func @transform_0(%arg0: i32, %arg1: i32, %arg2: i32) -> (i32, i32) {
    %c0_i32 = arith.constant 0 : i32
    return %arg0, %arg2 : i32, i32
  }
  func.func @transform_1(%arg0: i32, %arg1: i32, %arg2: i32) -> (i32, i32) {
    %c0_i32 = arith.constant 0 : i32
    return %arg2, %arg1 : i32, i32
  }
  func.func @transform_2(%arg0: i32, %arg1: i32, %arg2: i32) -> (i32, i32) {
    %c0_i32 = arith.constant 0 : i32
    return %arg2, %arg1 : i32, i32
  }
  func.func @transform_3(%arg0: i32, %arg1: i32, %arg2: i32) -> (i32, i32) {
    %c0_i32 = arith.constant 0 : i32
    return %arg2, %arg1 : i32, i32
  }
  func.func @transform_4(%arg0: i32, %arg1: i32, %arg2: i32) -> (i32, i32) {
    %c0_i32 = arith.constant 0 : i32
    %c0_i32_0 = arith.constant 0 : i32
    return %c0_i32, %arg1 : i32, i32
  }
  func.func @transform_5(%arg0: i32, %arg1: i32, %arg2: i32) -> (i32, i32) {
    %c0_i32 = arith.constant 0 : i32
    %c0_i32_0 = arith.constant 0 : i32
    return %c0_i32, %arg1 : i32, i32
  }
  func.func @transform_6(%arg0: i32, %arg1: i32, %arg2: i32) -> (i32, i32) {
    %c0_i32 = arith.constant 0 : i32
    %c0_i32_0 = arith.constant 0 : i32
    return %c0_i32, %arg1 : i32, i32
  }
  func.func @transform_7(%arg0: i32, %arg1: i32, %arg2: i32) -> (i32, i32) {
    %c0_i32 = arith.constant 0 : i32
    return %arg0, %arg1 : i32, i32
  }
}

</mosaic_0001>

<llo_original>
// kernel: tpu_custom_call.1
$region0: #{tpu_custom_call.1}
  #allocation0 [shape = 'u32[]', space=smem, size = 0x4, offset = 0x4, fixed_abs, tag = 'smem constant byte address 0x4 - core index']
  #allocation1 [shape = 'u32[144,128]{1,0:T(1,128)}', space=vmem, size = 0x12000, scoped, tag = 'internal scratch']
  #allocation2 [shape = 'f32[16,128]{1,0:T(8,128)}', space=vmem, size = 0x2000, scoped, tag = 'scratch operand']
  %s0 = inlined_call_operand.hbm [shape: f32[16,128], index: 0, kind: input, shape index: {}]
  %s1 = inlined_call_operand.hbm [shape: f32[128,128], index: 1, kind: input, shape index: {}]
  %s2 = inlined_call_operand.hbm [shape: f32[128,128], index: 2, kind: input, shape index: {}]
  %s3 = inlined_call_operand.hbm [shape: f32[128,128], index: 3, kind: input, shape index: {}]
  %s4 = inlined_call_operand.vmem [shape: f32[1,128], index: 4, kind: input, shape index: {}]
  %s5 = inlined_call_operand.vmem [shape: f32[1,128], index: 5, kind: input, shape index: {}]
  %s6 = inlined_call_operand.vmem [shape: f32[1,128], index: 6, kind: input, shape index: {}]
  %s7 = inlined_call_operand.hbm [shape: f32[16,128], index: 7, kind: output, shape index: {}]
  %s8 = sld [smem:[#allocation0]]
  $region62: #{tpu_custom_call.1} parent=0
    _
  %s10 = ssub.s32 1, %s8
  %s11 = scalar_select 0, %s10, %s8
  $region1: #{tpu_custom_call.1} parent=0
    #allocation3 [shape = 'u8[8192]{0}', space=vmem, size = 0x2000, scoped, tag = 'input window, operand 0, single buffered']
    #allocation4 [shape = 's32[1]{0}', space=sflag, size = 0x4, scoped, tag = 'scoped memory for tpu_custom_call.1']
    #allocation5 [shape = 's32[1]{0}', space=sflag, size = 0x4, scoped, tag = 'scoped memory for tpu_custom_call.1']
    #allocation6 [shape = 'u8[65536]{0}', space=vmem, size = 0x10000, scoped, tag = 'input window, operand 1, single buffered']
    #allocation7 [shape = 's32[1]{0}', space=sflag, size = 0x4, scoped, tag = 'scoped memory for tpu_custom_call.1']
    #allocation8 [shape = 'u8[65536]{0}', space=vmem, size = 0x10000, scoped, tag = 'input window, operand 2, single buffered']
    #allocation9 [shape = 'u8[65536]{0}', space=vmem, size = 0x10000, scoped, tag = 'input window, operand 3, single buffered']
    #allocation10 [shape = 's32[1]{0}', space=sflag, size = 0x4, scoped, tag = 'scoped memory for tpu_custom_call.1']
    #allocation11 [shape = 'u8[8192]{0}', space=vmem, size = 0x2000, scoped, tag = 'output window, operand 0, single buffered']
    %12 = vsyncpa [#allocation4], 0
    %13 = vsyncpa [#allocation7], 0
    %14 = vsyncpa [#allocation10], 0
    %15 = vsyncpa [#allocation5], 0
    // Predicated region
    $region2: #{tpu_custom_call.1} parent=1 // pred_check
      _
    $region3: #{tpu_custom_call.1} parent=1 // pred_check_branch
      %17 = sbr.rel (0) target = $region5
    $region4: #{tpu_custom_call.1} parent=1 // pred_region
      %s19 = ssub.s32 256, 256
      %20 = vsyncadd [#allocation4], %s19
      %s21 = sshll.u32 [#allocation3], 4
      %s22 = int_to_ptr.vmem [resolvable:$true] %s21
      %27 = dma.hbm_to_vmem [thread:$0]  %s0, 256, %s22, [#allocation4], 128, 128, 8
    $region5: #{tpu_custom_call.1} parent=1 // pred_fallthru
      _
    // Predicated region
    $region6: #{tpu_custom_call.1} parent=1 // pred_check
      _
    $region7: #{tpu_custom_call.1} parent=1 // pred_check_branch
      %29 = sbr.rel (0) target = $region9
    $region8: #{tpu_custom_call.1} parent=1 // pred_region
      %s31 = ssub.s32 2048, 2048
      %32 = vsyncadd [#allocation7], %s31
      %s33 = sshll.u32 [#allocation6], 4
      %s34 = int_to_ptr.vmem [resolvable:$true] %s33
      %39 = dma.hbm_to_vmem [thread:$0]  %s1, 2048, %s34, [#allocation7], 128, 128, 8
    $region9: #{tpu_custom_call.1} parent=1 // pred_fallthru
      _
    // Predicated region
    $region10: #{tpu_custom_call.1} parent=1 // pred_check
      _
    $region11: #{tpu_custom_call.1} parent=1 // pred_check_branch
      %41 = sbr.rel (0) target = $region13
    $region12: #{tpu_custom_call.1} parent=1 // pred_region
      %s43 = ssub.s32 2048, 2048
      %44 = vsyncadd [#allocation7], %s43
      %s45 = sshll.u32 [#allocation8], 4
      %s46 = int_to_ptr.vmem [resolvable:$true] %s45
      %51 = dma.hbm_to_vmem [thread:$0]  %s2, 2048, %s46, [#allocation7], 128, 128, 8
    $region13: #{tpu_custom_call.1} parent=1 // pred_fallthru
      _
    // Predicated region
    $region14: #{tpu_custom_call.1} parent=1 // pred_check
      _
    $region15: #{tpu_custom_call.1} parent=1 // pred_check_branch
      %53 = sbr.rel (0) target = $region17
    $region16: #{tpu_custom_call.1} parent=1 // pred_region
      %s55 = ssub.s32 2048, 2048
      %56 = vsyncadd [#allocation10], %s55
      %s57 = sshll.u32 [#allocation9], 4
      %s58 = int_to_ptr.vmem [resolvable:$true] %s57
      %63 = dma.hbm_to_vmem [thread:$0]  %s3, 2048, %s58, [#allocation10], 128, 128, 8
    $region17: #{tpu_custom_call.1} parent=1 // pred_fallthru
      _
    // Predicated region
    $region18: #{tpu_custom_call.1} parent=1 // pred_check
      _
    $region19: #{tpu_custom_call.1} parent=1 // pred_check_branch
      %65 = sbr.rel (0) target = $region21
    $region20: #{tpu_custom_call.1} parent=1 // pred_region
      _
    $region21: #{tpu_custom_call.1} parent=1 // pred_fallthru
      _
    // Predicated region
    $region22: #{tpu_custom_call.1} parent=1 // pred_check
      _
    $region23: #{tpu_custom_call.1} parent=1 // pred_check_branch
      %67 = sbr.rel (0) target = $region25
    $region24: #{tpu_custom_call.1} parent=1 // pred_region
      _
    $region25: #{tpu_custom_call.1} parent=1 // pred_fallthru
      _
    // Predicated region
    $region26: #{tpu_custom_call.1} parent=1 // pred_check
      _
    $region27: #{tpu_custom_call.1} parent=1 // pred_check_branch
      %69 = sbr.rel (0) target = $region29
    $region28: #{tpu_custom_call.1} parent=1 // pred_region
      _
    $region29: #{tpu_custom_call.1} parent=1 // pred_fallthru
      _
    // Predicated region
    $region30: #{tpu_custom_call.1} parent=1 // pred_check
      _
    $region31: #{tpu_custom_call.1} parent=1 // pred_check_branch
      %71 = sbr.rel (0) target = $region33
    $region32: #{tpu_custom_call.1} parent=1 // pred_region
      %72 = dma.done [#allocation4], 256
    $region33: #{tpu_custom_call.1} parent=1 // pred_fallthru
      _
    // Predicated region
    $region34: #{tpu_custom_call.1} parent=1 // pred_check
      _
    $region35: #{tpu_custom_call.1} parent=1 // pred_check_branch
      %74 = sbr.rel (0) target = $region37
    $region36: #{tpu_custom_call.1} parent=1 // pred_region
      %75 = dma.done [#allocation7], 2048
    $region37: #{tpu_custom_call.1} parent=1 // pred_fallthru
      _
    // Predicated region
    $region38: #{tpu_custom_call.1} parent=1 // pred_check
      _
    $region39: #{tpu_custom_call.1} parent=1 // pred_check_branch
      %77 = sbr.rel (0) target = $region41
    $region40: #{tpu_custom_call.1} parent=1 // pred_region
      %78 = dma.done [#allocation7], 2048
    $region41: #{tpu_custom_call.1} parent=1 // pred_fallthru
      _
    // Predicated region
    $region42: #{tpu_custom_call.1} parent=1 // pred_check
      _
    $region43: #{tpu_custom_call.1} parent=1 // pred_check_branch
      %80 = sbr.rel (0) target = $region45
    $region44: #{tpu_custom_call.1} parent=1 // pred_region
      %81 = dma.done [#allocation10], 2048
    $region45: #{tpu_custom_call.1} parent=1 // pred_fallthru
      _
    %p82 = scmp.eq.s32.totalorder 0, 0
    // Predicated region
    $region46: #{tpu_custom_call.1} parent=1 // pred_check
      %p83 = pneg %p82
    $region47: #{tpu_custom_call.1} parent=1 // pred_check_branch
      %85 = sbr.rel (%p83) target = $region49
    $region48: #{tpu_custom_call.1} parent=1 // pred_region
      %86 = vst [vmem:[#allocation2] sm:$0xff] 0.0
      %87 = vst [vmem:[#allocation2 + $0x8] sm:$0xff] 0.0
    $region49: #{tpu_custom_call.1} parent=1 // pred_fallthru
      _
    %v88 = vld [vmem:[#allocation6] sm:$0xff]
    %v89 = vld [vmem:[#allocation6 + $0x8] sm:$0xff]
    %v90 = vld [vmem:[#allocation6 + $0x10] sm:$0xff]
    %v91 = vld [vmem:[#allocation6 + $0x18] sm:$0xff]
    %v92 = vld [vmem:[#allocation6 + $0x20] sm:$0xff]
    %v93 = vld [vmem:[#allocation6 + $0x28] sm:$0xff]
    %v94 = vld [vmem:[#allocation6 + $0x30] sm:$0xff]
    %v95 = vld [vmem:[#allocation6 + $0x38] sm:$0xff]
    %v96 = vld [vmem:[#allocation6 + $0x40] sm:$0xff]
    %v97 = vld [vmem:[#allocation6 + $0x48] sm:$0xff]
    %v98 = vld [vmem:[#allocation6 + $0x50] sm:$0xff]
    %v99 = vld [vmem:[#allocation6 + $0x58] sm:$0xff]
    %v100 = vld [vmem:[#allocation6 + $0x60] sm:$0xff]
    %v101 = vld [vmem:[#allocation6 + $0x68] sm:$0xff]
    %v102 = vld [vmem:[#allocation6 + $0x70] sm:$0xff]
    %v103 = vld [vmem:[#allocation6 + $0x78] sm:$0xff]
    %v104 = vld [vmem:[#allocation8] sm:$0xff]
    %v105 = vld [vmem:[#allocation8 + $0x8] sm:$0xff]
    %v106 = vld [vmem:[#allocation8 + $0x10] sm:$0xff]
    %v107 = vld [vmem:[#allocation8 + $0x18] sm:$0xff]
    %v108 = vld [vmem:[#allocation8 + $0x20] sm:$0xff]
    %v109 = vld [vmem:[#allocation8 + $0x28] sm:$0xff]
    %v110 = vld [vmem:[#allocation8 + $0x30] sm:$0xff]
    %v111 = vld [vmem:[#allocation8 + $0x38] sm:$0xff]
    %v112 = vld [vmem:[#allocation8 + $0x40] sm:$0xff]
    %v113 = vld [vmem:[#allocation8 + $0x48] sm:$0xff]
    %v114 = vld [vmem:[#allocation8 + $0x50] sm:$0xff]
    %v115 = vld [vmem:[#allocation8 + $0x58] sm:$0xff]
    %v116 = vld [vmem:[#allocation8 + $0x60] sm:$0xff]
    %v117 = vld [vmem:[#allocation8 + $0x68] sm:$0xff]
    %v118 = vld [vmem:[#allocation8 + $0x70] sm:$0xff]
    %v119 = vld [vmem:[#allocation8 + $0x78] sm:$0xff]
    %v120 = vld [vmem:[#allocation9] sm:$0xff]
    %v121 = vld [vmem:[#allocation9 + $0x8] sm:$0xff]
    %v122 = vld [vmem:[#allocation9 + $0x10] sm:$0xff]
    %v123 = vld [vmem:[#allocation9 + $0x18] sm:$0xff]
    %v124 = vld [vmem:[#allocation9 + $0x20] sm:$0xff]
    %v125 = vld [vmem:[#allocation9 + $0x28] sm:$0xff]
    %v126 = vld [vmem:[#allocation9 + $0x30] sm:$0xff]
    %v127 = vld [vmem:[#allocation9 + $0x38] sm:$0xff]
    %v128 = vld [vmem:[#allocation9 + $0x40] sm:$0xff]
    %v129 = vld [vmem:[#allocation9 + $0x48] sm:$0xff]
    %v130 = vld [vmem:[#allocation9 + $0x50] sm:$0xff]
    %v131 = vld [vmem:[#allocation9 + $0x58] sm:$0xff]
    %v132 = vld [vmem:[#allocation9 + $0x60] sm:$0xff]
    %v133 = vld [vmem:[#allocation9 + $0x68] sm:$0xff]
    %v134 = vld [vmem:[#allocation9 + $0x70] sm:$0xff]
    %v135 = vld [vmem:[#allocation9 + $0x78] sm:$0xff]
    %v136 = vmul.f32 %v104, %v120
    %v137 = vmul.f32 %v105, %v121
    %v138 = vmul.f32 %v106, %v122
    %v139 = vmul.f32 %v107, %v123
    %v140 = vmul.f32 %v108, %v124
    %v141 = vmul.f32 %v109, %v125
    %v142 = vmul.f32 %v110, %v126
    %v143 = vmul.f32 %v111, %v127
    %v144 = vmul.f32 %v112, %v128
    %v145 = vmul.f32 %v113, %v129
    %v146 = vmul.f32 %v114, %v130
    %v147 = vmul.f32 %v115, %v131
    %v148 = vmul.f32 %v116, %v132
    %v149 = vmul.f32 %v117, %v133
    %v150 = vmul.f32 %v118, %v134
    %v151 = vmul.f32 %v119, %v135
    %v152 = vadd.f32 %v88, %v136
    %v153 = vadd.f32 %v89, %v137
    %v154 = vadd.f32 %v90, %v138
    %v155 = vadd.f32 %v91, %v139
    %v156 = vadd.f32 %v92, %v140
    %v157 = vadd.f32 %v93, %v141
    %v158 = vadd.f32 %v94, %v142
    %v159 = vadd.f32 %v95, %v143
    %v160 = vadd.f32 %v96, %v144
    %v161 = vadd.f32 %v97, %v145
    %v162 = vadd.f32 %v98, %v146
    %v163 = vadd.f32 %v99, %v147
    %v164 = vadd.f32 %v100, %v148
    %v165 = vadd.f32 %v101, %v149
    %v166 = vadd.f32 %v102, %v150
    %v167 = vadd.f32 %v103, %v151
    %v168 = vld [vmem:[#allocation3] sm:$0xff]
    %v169 = vld [vmem:[#allocation3 + $0x8] sm:$0xff]
    %v170 = vld [vmem:[#allocation2] sm:$0xff]
    %v171 = vld [vmem:[#allocation2 + $0x8] sm:$0xff]
    %172 = vmatprep.subr.mxu0 0.0
    %173 = vmatpush1.msra.mxu0 %v152
    %174 = vmatprep.subr.mxu0 0.0
    %175 = vmatpush1.msra.mxu0 %v153
    %176 = vmatprep.subr.mxu0 0.0
    %177 = vmatpush1.msra.mxu0 %v154
    %178 = vmatprep.subr.mxu0 0.0
    %179 = vmatpush1.msra.mxu0 %v155
    %180 = vmatprep.subr.mxu0 0.0
    %181 = vmatpush1.msra.mxu0 %v156
    %182 = vmatprep.subr.mxu0 0.0
    %183 = vmatpush1.msra.mxu0 %v157
    %184 = vmatprep.subr.mxu0 0.0
    %185 = vmatpush1.msra.mxu0 %v158
    %186 = vmatprep.subr.mxu0 0.0
    %187 = vmatpush1.msra.mxu0 %v159
    %188 = vmatprep.subr.mxu0 0.0
    %189 = vmatpush1.msra.mxu0 %v160
    %190 = vmatprep.subr.mxu0 0.0
    %191 = vmatpush1.msra.mxu0 %v161
    %192 = vmatprep.subr.mxu0 0.0
    %193 = vmatpush1.msra.mxu0 %v162
    %194 = vmatprep.subr.mxu0 0.0
    %195 = vmatpush1.msra.mxu0 %v163
    %196 = vmatprep.subr.mxu0 0.0
    %197 = vmatpush1.msra.mxu0 %v164
    %198 = vmatprep.subr.mxu0 0.0
    %199 = vmatpush1.msra.mxu0 %v165
    %200 = vmatprep.subr.mxu0 0.0
    %201 = vmatpush1.msra.mxu0 %v166
    %202 = vmatprep.subr.mxu0 0.0
    %203 = vmatpush1.msra.mxu0 %v167
    %204 = vmatprep.subr.mxu0 0.0
    %205 = vmatpush1.msra.mxu0 0.0
    %206 = vmatprep.subr.mxu0 0.0
    %207 = vmatpush1.msra.mxu0 0.0
    %208 = vmatprep.subr.mxu0 0.0
    %209 = vmatpush1.msra.mxu0 0.0
    %210 = vmatprep.subr.mxu0 0.0
    %211 = vmatpush1.msra.mxu0 0.0
    %212 = vmatprep.subr.mxu0 0.0
    %213 = vmatpush1.msra.mxu0 0.0
    %214 = vmatprep.subr.mxu0 0.0
    %215 = vmatpush1.msra.mxu0 0.0
    %216 = vmatprep.subr.mxu0 0.0
    %217 = vmatpush1.msra.mxu0 0.0
    %218 = vmatprep.subr.mxu0 0.0
    %219 = vmatpush1.msra.mxu0 0.0
    %220 = vmatprep.subr.mxu0 0.0
    %221 = vmatpush1.msra.mxu0 0.0
    %222 = vmatprep.subr.mxu0 0.0
    %223 = vmatpush1.msra.mxu0 0.0
    %224 = vmatprep.subr.mxu0 0.0
    %225 = vmatpush1.msra.mxu0 0.0
    %226 = vmatprep.subr.mxu0 0.0
    %227 = vmatpush1.msra.mxu0 0.0
    %228 = vmatprep.subr.mxu0 0.0
    %229 = vmatpush1.msra.mxu0 0.0
    %230 = vmatprep.subr.mxu0 0.0
    %231 = vmatpush1.msra.mxu0 0.0
    %232 = vmatprep.subr.mxu0 0.0
    %233 = vmatpush1.msra.mxu0 0.0
    %234 = vmatprep.subr.mxu0 0.0
    %235 = vmatpush1.msra.mxu0 0.0
    %236 = vmatprep.mubr.f32.mxu0 0.0
    %237 = vmatmul.mubr.f32.gmra.mrb[0].mxu0 %v168
    %v238 = vpop.f32.mrb[0].mxu0
    %v239 = vadd.f32 0.0, %v238
    %v240 = vpop.f32.mrb[0].mxu0
    %241 = vmatprep.mubr.f32.mxu0 0.0
    %242 = vmatmul.mubr.f32.gmra.mrb[0].mxu0 %v169
    %v243 = vpop.f32.mrb[0].mxu0
    %v244 = vadd.f32 0.0, %v243
    %v245 = vpop.f32.mrb[0].mxu0
    %246 = vdwg.mxu0
    %v247 = vadd.f32 %v170, %v239
    %v248 = vadd.f32 %v171, %v244
    %249 = vst [vmem:[#allocation2] sm:$0xff] %v247
    %250 = vst [vmem:[#allocation2 + $0x8] sm:$0xff] %v248
    // Predicated region
    $region50: #{tpu_custom_call.1} parent=1 // pred_check
      %p251 = pneg %p82
    $region51: #{tpu_custom_call.1} parent=1 // pred_check_branch
      %253 = sbr.rel (%p251) target = $region53
    $region52: #{tpu_custom_call.1} parent=1 // pred_region
      %v254 = vld [vmem:[%s4] sm:$0x1]
      %v255 = vld [vmem:[%s5] sm:$0x1]
      %v256 = vld [vmem:[%s6] sm:$0x1]
      %v257 = vmul.f32 %v255, %v256
      %v258 = vadd.f32 %v254, %v257
      %v259 = vld [vmem:[#allocation2] sm:$0xff]
      %v260 = vld [vmem:[#allocation2 + $0x8] sm:$0xff]
      %v262 = vlaneseq
      %v263 = vshrl.u32 %v262, 7
      %v264 = vsub.s32 0, %v263
      %v265 = vrot.slane %v258, %v264
      %v267 = vadd.f32 %v259, %v265
      %v268 = vadd.f32 %v260, %v265
      %269 = vst [vmem:[#allocation11] sm:$0xff] %v267
      %270 = vst [vmem:[#allocation11 + $0x8] sm:$0xff] %v268
    $region53: #{tpu_custom_call.1} parent=1 // pred_fallthru
      _
    // Predicated region
    $region54: #{tpu_custom_call.1} parent=1 // pred_check
      _
    $region55: #{tpu_custom_call.1} parent=1 // pred_check_branch
      %272 = sbr.rel (0) target = $region57
    $region56: #{tpu_custom_call.1} parent=1 // pred_region
      %s274 = ssub.s32 256, 256
      %275 = vsyncadd [#allocation5], %s274
      %s276 = sshll.u32 [#allocation11], 4
      %s277 = int_to_ptr.vmem [resolvable:$true] %s276
      %282 = dma.vmem_to_hbm [thread:$0]  %s277, 256, %s7, [#allocation5], 128, 128, 8
    $region57: #{tpu_custom_call.1} parent=1 // pred_fallthru
      _
    // Predicated region
    $region58: #{tpu_custom_call.1} parent=1 // pred_check
      _
    $region59: #{tpu_custom_call.1} parent=1 // pred_check_branch
      %284 = sbr.rel (0) target = $region61
    $region60: #{tpu_custom_call.1} parent=1 // pred_region
      %285 = dma.done [#allocation5], 256
    $region61: #{tpu_custom_call.1} parent=1 // pred_fallthru
      _
    %286 = vsyncpa [#allocation4], 1
    %287 = vsyncpa [#allocation7], 1
    %288 = vsyncpa [#allocation10], 1
    %289 = vsyncpa [#allocation5], 1

</llo_original>
